<compile_context>
chip_gen: v6e
topology: v6e:2x2x1
jax: 0.10.0
libtpu: 0.0.40
codegen_flags: <defaults>
</compile_context>

<pallas_src>
import functools

import jax
import jax.numpy as jnp
from jax.experimental import pallas as pl
from jax.experimental.pallas import tpu as pltpu

LANES = 128          # pad every feature dimension to the vreg lane width

# Rows per grid step for the batch-tiled path.  At TM=2048 the double-buffered
# working set is ~9 MiB (see _grid_step_vmem_bytes), well under the 32 MiB
# scoped-VMEM ceiling that is safe on v5e (128 MiB phys), v6e (128 MiB phys)
# and v7x (64 MiB phys per TC), while making per-step pipeline overhead <5%.
TM = 2048

# Scoped-VMEM limit that never exceeds physical VMEM on any generation.
_VMEM_LIMIT_BYTES = 32 * 1024 * 1024


def qnet_kernel(x_ref, w1_ref, w_ref, b_ref, out_ref):
    """Full forward pass (4 matmuls + 3 ReLUs) on one batch tile, in VMEM.

    x_ref : (rows, state_size)  f32
    w1_ref: (state_size, 128)   bf16  fc1 weight, out-dim zero-padded to 128
    w_ref : (3, 128, 128)       bf16  fc2 / fc3 / q weights, zero-padded
    b_ref : (4, 1, 128)         f32   fc1 / fc2 / fc3 / q biases, zero-padded
    out_ref:(rows, 128)         f32   q-values in lanes [:action_size], rest 0

    MXU runs on bf16 operands with f32 accumulation; bias-add / ReLU stay f32.
    """
    bf16 = jnp.bfloat16
    x = x_ref[...].astype(bf16)
    h = jnp.dot(x, w1_ref[...], preferred_element_type=jnp.float32) + b_ref[0]
    h = jnp.maximum(h, 0.0)
    h = jnp.dot(h.astype(bf16), w_ref[0], preferred_element_type=jnp.float32) + b_ref[1]
    h = jnp.maximum(h, 0.0)
    h = jnp.dot(h.astype(bf16), w_ref[1], preferred_element_type=jnp.float32) + b_ref[2]
    h = jnp.maximum(h, 0.0)
    q = jnp.dot(h.astype(bf16), w_ref[2], preferred_element_type=jnp.float32) + b_ref[3]
    out_ref[...] = q.astype(out_ref.dtype)


def _cost_estimate(rows, S):
    flops = 2 * rows * (S * LANES + 3 * LANES * LANES)
    bytes_accessed = (rows * S * 4                              # x (f32)
                      + S * LANES * 2 + 3 * LANES * LANES * 2   # bf16 weights
                      + 4 * LANES * 4                           # f32 biases
                      + rows * LANES * 4)                       # out slab (f32)
    return pl.CostEstimate(flops=flops, bytes_accessed=bytes_accessed,
                           transcendentals=0)


def _grid_step_vmem_bytes(S):
    """Explicit double-buffered VMEM footprint of one grid step (bytes)."""
    x_bufs = 2 * TM * S * 4                    # pipelined x tiles (f32)
    out_bufs = 2 * TM * LANES * 4              # pipelined output slabs (f32)
    w_bufs = 2 * (S * LANES * 2               # bf16 w1
                  + 3 * LANES * LANES * 2      # bf16 w2/w3/wq
                  + 4 * LANES * 4)             # f32 biases
    act = 6 * TM * LANES * 4                   # generous bound for activation temps
    return x_bufs + out_bufs + w_bufs + act


def qnetwork_forward_padded(x, packed):
    """x: (B, state_size) f32 -> (Bp, 128) f32 lane-dense q slab.

    Lanes [:action_size] hold the q-values, the remaining lanes are exactly 0;
    rows [B:Bp] are padding.  DQN consumers that only need max/argmax over
    actions should reduce this slab inside their own jit so the slice/reduction
    fuses instead of costing a separate HBM pass over a 32x-oversized array.
    """
    B, S = x.shape
    w1, w_rest, b = packed["w1"], packed["w_rest"], packed["b"]

    if B <= TM:
        # Single full-array block, no grid: no pipeline/prologue machinery for
        # a call that is pure fixed overhead (the latency-critical act() path).
        return pl.pallas_call(
            qnet_kernel,
            out_shape=jax.ShapeDtypeStruct((B, LANES), jnp.float32),
            cost_estimate=_cost_estimate(B, S),
        )(x, w1, w_rest, b)

    # Batch-tiled grid path (replay-buffer sized batches).
    # Validate TM against the smallest per-TC budget (v7x) with 2x headroom.
    assert 2 * _grid_step_vmem_bytes(S) <= _VMEM_LIMIT_BYTES, (
        "TM too large for the v7x per-TensorCore VMEM budget")
    n_blocks = pl.cdiv(B, TM)
    Bp = n_blocks * TM
    if Bp != B:
        x = jnp.pad(x, ((0, Bp - B), (0, 0)))
    # NOTE(v7x): "parallel" is the portable choice; if an xprof trace shows only
    # one TensorCore busy on v7x, switch this axis to pltpu.CORE_PARALLEL (or an
    # explicit pl.core_map per-core batch split) to get both TCs working.
    return pl.pallas_call(
        qnet_kernel,
        out_shape=jax.ShapeDtypeStruct((Bp, LANES), jnp.float32),
        grid=(n_blocks,),
        in_specs=[
            pl.BlockSpec((TM, S), lambda i: (i, 0)),
            # Weights/biases: constant block index -> fetched once, kept
            # resident across grid steps.  Their (tiny, ~0.2 MiB) default
            # double-buffer is included in _grid_step_vmem_bytes.
            pl.BlockSpec(w1.shape, lambda i: (0, 0)),
            pl.BlockSpec(w_rest.shape, lambda i: (0, 0, 0)),
            pl.BlockSpec(b.shape, lambda i: (0, 0, 0)),
        ],
        out_specs=pl.BlockSpec((TM, LANES), lambda i: (i, 0)),
        compiler_params=pltpu.CompilerParams(
            dimension_semantics=("parallel",),
            vmem_limit_bytes=_VMEM_LIMIT_BYTES,
        ),
        cost_estimate=_cost_estimate(Bp, S),
    )(x, w1, w_rest, b)


def qnetwork_forward(x, packed, action_size):
    """(B, state_size) -> (B, action_size) q-values (matches the nn.Module).

    `action_size` must be a static Python int.  Call this under your own
    jax.jit so the final slice fuses with the consumer's graph instead of
    re-reading the padded slab in a separate HBM pass.
    """
    B = x.shape[0]
    return qnetwork_forward_padded(x, packed)[:B, :action_size]


def init_params(key, state_size, action_size):
    """nn.Linear-style init: U(-1/sqrt(fan_in), 1/sqrt(fan_in)); weights stored (in, out)."""
    dims = [(state_size, 24), (24, 48), (48, 24), (24, action_size)]
    names = ["1", "2", "3", "q"]
    params = {}
    for (fan_in, fan_out), n in zip(dims, names):
        key, kw, kb = jax.random.split(key, 3)
        bound = 1.0 / jnp.sqrt(jnp.float32(fan_in))
        params[f"w{n}"] = jax.random.uniform(
            kw, (fan_in, fan_out), jnp.float32, -bound, bound)
        params[f"b{n}"] = jax.random.uniform(
            kb, (1, fan_out), jnp.float32, -bound, bound)
    return params


def pack_params(params, state_size, action_size):
    """One-time packing of the 4 layers into 3 lane-padded (128-wide) buffers.

    Weights are stored bf16 (MXU operands); biases stay f32 (VPU adds).
    Zero padding is exact: padded weight rows/cols and bias lanes are 0 and
    ReLU(0) = 0, so the padded lanes of every activation stay exactly 0.
    """
    del state_size, action_size  # shapes are carried by the arrays themselves

    def pad_w(w):
        out = jnp.zeros((LANES, LANES), jnp.float32)
        return out.at[: w.shape[0], : w.shape[1]].set(w).astype(jnp.bfloat16)

    def pad_b(b):
        out = jnp.zeros((1, LANES), jnp.float32)
        return out.at[:, : b.shape[1]].set(b)

    w1 = jnp.zeros((params["w1"].shape[0], LANES), jnp.float32)
    w1 = w1.at[:, : params["w1"].shape[1]].set(params["w1"]).astype(jnp.bfloat16)
    w_rest = jnp.stack(
        [pad_w(params["w2"]), pad_w(params["w3"]), pad_w(params["wq"])])  # (3,128,128) bf16
    b = jnp.stack(
        [pad_b(params["b1"]), pad_b(params["b2"]),
         pad_b(params["b3"]), pad_b(params["bq"])])                        # (4,1,128) f32
    return {"w1": w1, "w_rest": w_rest, "b": b}


def reference_forward_f32(x, p):
    """Pure f32 reference (exact nn.Module semantics)."""
    h = jnp.maximum(x @ p["w1"] + p["b1"], 0.0)
    h = jnp.maximum(h @ p["w2"] + p["b2"], 0.0)
    h = jnp.maximum(h @ p["w3"] + p["b3"], 0.0)
    return h @ p["wq"] + p["bq"]


def reference_forward_bf16(x, p):
    """Reference with the kernel's bf16-operand / f32-accumulate matmuls."""
    bf16 = jnp.bfloat16

    def mm(a, w):
        return jnp.dot(a.astype(bf16), w.astype(bf16),
                       preferred_element_type=jnp.float32)

    h = jnp.maximum(mm(x, p["w1"]) + p["b1"], 0.0)
    h = jnp.maximum(mm(h, p["w2"]) + p["b2"], 0.0)
    h = jnp.maximum(mm(h, p["w3"]) + p["b3"], 0.0)
    return mm(h, p["wq"]) + p["bq"]


if __name__ == "__main__":
    state_size = 8
    action_size = 4

    key = jax.random.PRNGKey(0)
    key, kx1, kx2 = jax.random.split(key, 3)
    params = init_params(key, state_size, action_size)
    packed = pack_params(params, state_size, action_size)

    # Slice happens under jit so it fuses with the surrounding graph.
    fwd = jax.jit(functools.partial(qnetwork_forward, action_size=action_size))

    # Path 1: tiny batch -> single block, no grid (action-selection path).
    x_small = jax.random.normal(kx1, (8, state_size), jnp.float32)
    out_small = jax.block_until_ready(fwd(x_small, packed))
    assert out_small.shape == (8, action_size)
    assert jnp.allclose(out_small, reference_forward_bf16(x_small, params),
                        atol=5e-3, rtol=5e-3), "small-batch mismatch (bf16 ref)"
    assert jnp.allclose(out_small, reference_forward_f32(x_small, params),
                        atol=5e-2, rtol=5e-2), "small-batch mismatch (f32 ref)"

    # Path 2: batch-tiled 'parallel' grid (B > TM and not a multiple of TM).
    B_big = 2 * TM + 600
    x_big = jax.random.normal(kx2, (B_big, state_size), jnp.float32)
    out_big = jax.block_until_ready(fwd(x_big, packed))
    assert out_big.shape == (B_big, action_size)
    assert jnp.allclose(out_big, reference_forward_bf16(x_big, params),
                        atol=5e-3, rtol=5e-3), "big-batch mismatch (bf16 ref)"
    assert jnp.allclose(out_big, reference_forward_f32(x_big, params),
                        atol=5e-2, rtol=5e-2), "big-batch mismatch (f32 ref)"

    print("KERNEL_OK")
</pallas_src>

<mosaic_0001>
module attributes {stable_mosaic.version = 11 : i64} {
  func.func @qnet_kernel(%arg0: memref<8x8xf32, #tpu.memory_space<vmem>>, %arg1: memref<8x128xbf16, #tpu.memory_space<vmem>>, %arg2: memref<3x128x128xbf16, #tpu.memory_space<vmem>>, %arg3: memref<4x1x128xf32, #tpu.memory_space<vmem>>, %arg4: memref<8x128xf32, #tpu.memory_space<vmem>>) attributes {dimension_semantics = [], scalar_prefetch = 0 : i64, scratch_operands = 0 : i64, tpu.core_type = #tpu.core_type<tc>} {
    %c0 = arith.constant 0 : index
    %c0_0 = arith.constant 0 : index
    %0 = vector.load %arg0[%c0, %c0_0] : memref<8x8xf32, #tpu.memory_space<vmem>>, vector<8x8xf32>
    %1 = arith.truncf %0 : vector<8x8xf32> to vector<8x8xbf16>
    %c0_1 = arith.constant 0 : index
    %c0_2 = arith.constant 0 : index
    %2 = vector.load %arg1[%c0_1, %c0_2] : memref<8x128xbf16, #tpu.memory_space<vmem>>, vector<8x128xbf16>
    %cst = arith.constant dense<0.000000e+00> : vector<8x128xf32>
    %3 = tpu.matmul %1, %2, %cst {dimension_numbers = #tpu.dot_dimension_numbers<[1], [0], [0], [1], [0, 0, 1, 1], [], []>} : vector<8x8xbf16>, vector<8x128xbf16>, vector<8x128xf32> -> vector<8x128xf32>
    %c0_3 = arith.constant 0 : index
    %c0_4 = arith.constant 0 : index
    %c0_5 = arith.constant 0 : index
    %4 = vector.load %arg3[%c0_3, %c0_4, %c0_5] : memref<4x1x128xf32, #tpu.memory_space<vmem>>, vector<1x1x128xf32>
    %5 = vector.shape_cast %4 : vector<1x1x128xf32> to vector<1x128xf32>
    %6 = vector.broadcast %5 : vector<1x128xf32> to vector<8x128xf32>
    %7 = arith.addf %3, %6 : vector<8x128xf32>
    %cst_6 = arith.constant 0.000000e+00 : f32
    %8 = vector.broadcast %cst_6 : f32 to vector<8x128xf32>
    %9 = arith.maximumf %7, %8 : vector<8x128xf32>
    %10 = arith.truncf %9 : vector<8x128xf32> to vector<8x128xbf16>
    %c0_7 = arith.constant 0 : index
    %c0_8 = arith.constant 0 : index
    %c0_9 = arith.constant 0 : index
    %11 = vector.load %arg2[%c0_7, %c0_8, %c0_9] : memref<3x128x128xbf16, #tpu.memory_space<vmem>>, vector<1x128x128xbf16>
    %12 = vector.shape_cast %11 : vector<1x128x128xbf16> to vector<128x128xbf16>
    %cst_10 = arith.constant dense<0.000000e+00> : vector<8x128xf32>
    %13 = tpu.matmul %10, %12, %cst_10 {dimension_numbers = #tpu.dot_dimension_numbers<[1], [0], [0], [1], [0, 0, 1, 1], [], []>} : vector<8x128xbf16>, vector<128x128xbf16>, vector<8x128xf32> -> vector<8x128xf32>
    %c1 = arith.constant 1 : index
    %c0_11 = arith.constant 0 : index
    %c0_12 = arith.constant 0 : index
    %14 = vector.load %arg3[%c1, %c0_11, %c0_12] : memref<4x1x128xf32, #tpu.memory_space<vmem>>, vector<1x1x128xf32>
    %15 = vector.shape_cast %14 : vector<1x1x128xf32> to vector<1x128xf32>
    %16 = vector.broadcast %15 : vector<1x128xf32> to vector<8x128xf32>
    %17 = arith.addf %13, %16 : vector<8x128xf32>
    %cst_13 = arith.constant 0.000000e+00 : f32
    %18 = vector.broadcast %cst_13 : f32 to vector<8x128xf32>
    %19 = arith.maximumf %17, %18 : vector<8x128xf32>
    %20 = arith.truncf %19 : vector<8x128xf32> to vector<8x128xbf16>
    %c1_14 = arith.constant 1 : index
    %c0_15 = arith.constant 0 : index
    %c0_16 = arith.constant 0 : index
    %21 = vector.load %arg2[%c1_14, %c0_15, %c0_16] : memref<3x128x128xbf16, #tpu.memory_space<vmem>>, vector<1x128x128xbf16>
    %22 = vector.shape_cast %21 : vector<1x128x128xbf16> to vector<128x128xbf16>
    %cst_17 = arith.constant dense<0.000000e+00> : vector<8x128xf32>
    %23 = tpu.matmul %20, %22, %cst_17 {dimension_numbers = #tpu.dot_dimension_numbers<[1], [0], [0], [1], [0, 0, 1, 1], [], []>} : vector<8x128xbf16>, vector<128x128xbf16>, vector<8x128xf32> -> vector<8x128xf32>
    %c2 = arith.constant 2 : index
    %c0_18 = arith.constant 0 : index
    %c0_19 = arith.constant 0 : index
    %24 = vector.load %arg3[%c2, %c0_18, %c0_19] : memref<4x1x128xf32, #tpu.memory_space<vmem>>, vector<1x1x128xf32>
    %25 = vector.shape_cast %24 : vector<1x1x128xf32> to vector<1x128xf32>
    %26 = vector.broadcast %25 : vector<1x128xf32> to vector<8x128xf32>
    %27 = arith.addf %23, %26 : vector<8x128xf32>
    %cst_20 = arith.constant 0.000000e+00 : f32
    %28 = vector.broadcast %cst_20 : f32 to vector<8x128xf32>
    %29 = arith.maximumf %27, %28 : vector<8x128xf32>
    %30 = arith.truncf %29 : vector<8x128xf32> to vector<8x128xbf16>
    %c2_21 = arith.constant 2 : index
    %c0_22 = arith.constant 0 : index
    %c0_23 = arith.constant 0 : index
    %31 = vector.load %arg2[%c2_21, %c0_22, %c0_23] : memref<3x128x128xbf16, #tpu.memory_space<vmem>>, vector<1x128x128xbf16>
    %32 = vector.shape_cast %31 : vector<1x128x128xbf16> to vector<128x128xbf16>
    %cst_24 = arith.constant dense<0.000000e+00> : vector<8x128xf32>
    %33 = tpu.matmul %30, %32, %cst_24 {dimension_numbers = #tpu.dot_dimension_numbers<[1], [0], [0], [1], [0, 0, 1, 1], [], []>} : vector<8x128xbf16>, vector<128x128xbf16>, vector<8x128xf32> -> vector<8x128xf32>
    %c3 = arith.constant 3 : index
    %c0_25 = arith.constant 0 : index
    %c0_26 = arith.constant 0 : index
    %34 = vector.load %arg3[%c3, %c0_25, %c0_26] : memref<4x1x128xf32, #tpu.memory_space<vmem>>, vector<1x1x128xf32>
    %35 = vector.shape_cast %34 : vector<1x1x128xf32> to vector<1x128xf32>
    %36 = vector.broadcast %35 : vector<1x128xf32> to vector<8x128xf32>
    %37 = arith.addf %33, %36 : vector<8x128xf32>
    %c0_27 = arith.constant 0 : index
    %c0_28 = arith.constant 0 : index
    %38 = vector.load %arg4[%c0_27, %c0_28] : memref<8x128xf32, #tpu.memory_space<vmem>>, vector<8x128xf32>
    tpu.vector_store %arg4[%c0_27, %c0_28], %37 {strides = array<i32>} : memref<8x128xf32, #tpu.memory_space<vmem>>, vector<8x128xf32>,
    return
  }
}

</mosaic_0001>

<llo_original>
// kernel: qnetwork_forward.1
$region0: #{qnetwork_forward.1}
  #allocation0 [shape = 'u32[]', space=smem, size = 0x4, offset = 0x4, fixed_abs, tag = 'smem constant byte address 0x4 - core index']
  #allocation1 [shape = 'u32[144,128]{1,0:T(1,128)}', space=vmem, size = 0x12000, scoped, tag = 'internal scratch']
  %s0 = inlined_call_operand.hbm [shape: f32[8,8], index: 0, kind: input, shape index: {}]
  %s1 = inlined_call_operand.hbm [shape: bf16[8,128], index: 1, kind: input, shape index: {}]
  %s2 = inlined_call_operand.hbm [shape: bf16[3,128,128], index: 2, kind: input, shape index: {}]
  %s3 = inlined_call_operand.hbm [shape: f32[4,1,128], index: 3, kind: input, shape index: {}]
  %s4 = inlined_call_operand.vmem [shape: f32[8,128], index: 4, kind: output, shape index: {}]
  %s5 = sld [smem:[#allocation0]]
  $region42: #{qnetwork_forward.1} parent=0
    _
  %s7 = ssub.s32 1, %s5
  %s8 = scalar_select 0, %s7, %s5
  $region1: #{qnetwork_forward.1} parent=0
    #allocation2 [shape = 'u8[4096]{0}', space=vmem, size = 0x1000, scoped, tag = 'input window, operand 0, single buffered']
    #allocation3 [shape = 's32[1]{0}', space=sflag, size = 0x4, scoped, tag = 'scoped memory for qnetwork_forward.1']
    #allocation4 [shape = 'u8[2048]{0}', space=vmem, size = 0x800, scoped, tag = 'input window, operand 1, single buffered']
    #allocation5 [shape = 's32[1]{0}', space=sflag, size = 0x4, scoped, tag = 'scoped memory for qnetwork_forward.1']
    #allocation6 [shape = 'u8[98304]{0}', space=vmem, size = 0x18000, scoped, tag = 'input window, operand 2, single buffered']
    #allocation7 [shape = 'u8[2048]{0}', space=vmem, size = 0x800, scoped, tag = 'input window, operand 3, single buffered']
    #allocation8 [shape = 's32[1]{0}', space=sflag, size = 0x4, scoped, tag = 'scoped memory for qnetwork_forward.1']
    %9 = vsyncpa [#allocation3], 0
    %10 = vsyncpa [#allocation5], 0
    %11 = vsyncpa [#allocation8], 0
    // Predicated region
    $region2: #{qnetwork_forward.1} parent=1 // pred_check
      _
    $region3: #{qnetwork_forward.1} parent=1 // pred_check_branch
      %13 = sbr.rel (0) target = $region5
    $region4: #{qnetwork_forward.1} parent=1 // pred_region
      %s15 = ssub.s32 128, 128
      %16 = vsyncadd [#allocation3], %s15
      %s18 = sshll.u32 [#allocation2], 4
      %s19 = int_to_ptr.vmem [resolvable:$true] %s18
      %21 = dma.hbm_to_vmem [thread:$0]  %s0, 128, %s19, [#allocation3]
    $region5: #{qnetwork_forward.1} parent=1 // pred_fallthru
      _
    // Predicated region
    $region6: #{qnetwork_forward.1} parent=1 // pred_check
      _
    $region7: #{qnetwork_forward.1} parent=1 // pred_check_branch
      %23 = sbr.rel (0) target = $region9
    $region8: #{qnetwork_forward.1} parent=1 // pred_region
      %s25 = ssub.s32 64, 64
      %26 = vsyncadd [#allocation5], %s25
      %s28 = sshll.u32 [#allocation4], 4
      %s29 = int_to_ptr.vmem [resolvable:$true] %s28
      %31 = dma.hbm_to_vmem [thread:$0]  %s1, 64, %s29, [#allocation5]
    $region9: #{qnetwork_forward.1} parent=1 // pred_fallthru
      _
    // Predicated region
    $region10: #{qnetwork_forward.1} parent=1 // pred_check
      _
    $region11: #{qnetwork_forward.1} parent=1 // pred_check_branch
      %33 = sbr.rel (0) target = $region13
    $region12: #{qnetwork_forward.1} parent=1 // pred_region
      %s35 = ssub.s32 3072, 3072
      %36 = vsyncadd [#allocation5], %s35
      %s37 = sshll.u32 [#allocation6], 4
      %s38 = int_to_ptr.vmem [resolvable:$true] %s37
      %43 = dma.hbm_to_vmem [thread:$0]  %s2, 3072, %s38, [#allocation5], 64, 64, 4
    $region13: #{qnetwork_forward.1} parent=1 // pred_fallthru
      _
    // Predicated region
    $region14: #{qnetwork_forward.1} parent=1 // pred_check
      _
    $region15: #{qnetwork_forward.1} parent=1 // pred_check_branch
      %45 = sbr.rel (0) target = $region17
    $region16: #{qnetwork_forward.1} parent=1 // pred_region
      %s47 = ssub.s32 64, 64
      %48 = vsyncadd [#allocation8], %s47
      %s49 = sshll.u32 [#allocation7], 4
      %s50 = int_to_ptr.vmem [resolvable:$true] %s49
      %55 = dma.hbm_to_vmem [thread:$0]  %s3, 64, %s50, [#allocation8], 16, 16, 1
    $region17: #{qnetwork_forward.1} parent=1 // pred_fallthru
      _
    // Predicated region
    $region18: #{qnetwork_forward.1} parent=1 // pred_check
      _
    $region19: #{qnetwork_forward.1} parent=1 // pred_check_branch
      %57 = sbr.rel (0) target = $region21
    $region20: #{qnetwork_forward.1} parent=1 // pred_region
      %58 = dma.done [#allocation3], 128
    $region21: #{qnetwork_forward.1} parent=1 // pred_fallthru
      _
    // Predicated region
    $region22: #{qnetwork_forward.1} parent=1 // pred_check
      _
    $region23: #{qnetwork_forward.1} parent=1 // pred_check_branch
      %60 = sbr.rel (0) target = $region25
    $region24: #{qnetwork_forward.1} parent=1 // pred_region
      %61 = dma.done [#allocation5], 64
    $region25: #{qnetwork_forward.1} parent=1 // pred_fallthru
      _
    // Predicated region
    $region26: #{qnetwork_forward.1} parent=1 // pred_check
      _
    $region27: #{qnetwork_forward.1} parent=1 // pred_check_branch
      %63 = sbr.rel (0) target = $region29
    $region28: #{qnetwork_forward.1} parent=1 // pred_region
      %64 = dma.done [#allocation5], 3072
    $region29: #{qnetwork_forward.1} parent=1 // pred_fallthru
      _
    // Predicated region
    $region30: #{qnetwork_forward.1} parent=1 // pred_check
      _
    $region31: #{qnetwork_forward.1} parent=1 // pred_check_branch
      %66 = sbr.rel (0) target = $region33
    $region32: #{qnetwork_forward.1} parent=1 // pred_region
      %67 = dma.done [#allocation8], 64
    $region33: #{qnetwork_forward.1} parent=1 // pred_fallthru
      _
    %v69 = vld [vmem:[#allocation2] sm:$0xff]
    %v70 = vpack.c.bf16 %v69, %v69
    %v71 = vld [vmem:[#allocation4] sm:$0xf]
    %v72 = vld [vmem:[#allocation7] sm:$0x1]
    %v74 = vlaneseq
    %v75 = vshrl.u32 %v74, 7
    %v76 = vsub.s32 0, %v75
    %v77 = vrot.slane %v72, %v76
    %vm79 = vcmask 64512
    %v81 = vsel %vm79, %v70, 0
    %vm83 = vcmask 1043456
    %v85 = vsel %vm83, %v71, 0
    %87 = vmatprep.subr.bf16.mxu0 0
    %88 = vmatpush1.bf16.msra.mxu0 0
    %89 = vmatprep.subr.bf16.mxu0 0
    %90 = vmatpush1.bf16.msra.mxu0 0
    %91 = vmatprep.subr.bf16.mxu0 0
    %92 = vmatpush1.bf16.msra.mxu0 0
    %93 = vmatprep.subr.bf16.mxu0 0
    %94 = vmatpush1.bf16.msra.mxu0 0
    %95 = vmatprep.subr.bf16.mxu0 0
    %96 = vmatpush1.bf16.msra.mxu0 0
    %97 = vmatprep.subr.bf16.mxu0 0
    %98 = vmatpush1.bf16.msra.mxu0 0
    %99 = vmatprep.subr.bf16.mxu0 0
    %100 = vmatpush1.bf16.msra.mxu0 0
    %101 = vmatprep.subr.bf16.mxu0 0
    %102 = vmatpush1.bf16.msra.mxu0 %v85
    %103 = vmatprep.subr.bf16.mxu0 0
    %104 = vmatpush2.bf16.msra.mxu0 0
    %105 = vmatprep.subr.bf16.mxu0 0
    %106 = vmatpush2.bf16.msra.mxu0 0
    %107 = vmatprep.subr.bf16.mxu0 0
    %108 = vmatpush2.bf16.msra.mxu0 0
    %109 = vmatprep.subr.bf16.mxu0 0
    %110 = vmatpush2.bf16.msra.mxu0 0
    %111 = vmatprep.subr.bf16.mxu0 0
    %112 = vmatpush2.bf16.msra.mxu0 0
    %113 = vmatprep.subr.bf16.mxu0 0
    %114 = vmatpush2.bf16.msra.mxu0 0
    %115 = vmatprep.subr.bf16.mxu0 0
    %116 = vmatpush2.bf16.msra.mxu0 0
    %117 = vmatprep.subr.bf16.mxu0 0
    %118 = vmatpush2.bf16.msra.mxu0 0
    %119 = vmatprep.mubr.bf16.mxu0 0
    %120 = vmatmul.mubr.bf16.gmra.mxu0 %v81
    %v121 = vpop.f32.mrf.mxu0
    %v122 = vadd.f32 %v77, %v121
    %v123 = vpop.f32.mrf.mxu0
    %v124 = vpop.f32.mrf.mxu0
    %v125 = vpop.f32.mrf.mxu0
    %126 = vdwg.mxu0
    %v127 = vmax.f32 %v122, 0.0
    %v128 = vpack.c.bf16 %v127, %v127
    %v129 = vld [vmem:[#allocation6] sm:$0xf]
    %v130 = vld [vmem:[#allocation6 + $0x4] sm:$0xf]
    %v131 = vld [vmem:[#allocation6 + $0x8] sm:$0xf]
    %v132 = vld [vmem:[#allocation6 + $0xc] sm:$0xf]
    %v133 = vld [vmem:[#allocation6 + $0x10] sm:$0xf]
    %v134 = vld [vmem:[#allocation6 + $0x14] sm:$0xf]
    %v135 = vld [vmem:[#allocation6 + $0x18] sm:$0xf]
    %v136 = vld [vmem:[#allocation6 + $0x1c] sm:$0xf]
    %v137 = vld [vmem:[#allocation6 + $0x20] sm:$0xf]
    %v138 = vld [vmem:[#allocation6 + $0x24] sm:$0xf]
    %v139 = vld [vmem:[#allocation6 + $0x28] sm:$0xf]
    %v140 = vld [vmem:[#allocation6 + $0x2c] sm:$0xf]
    %v141 = vld [vmem:[#allocation6 + $0x30] sm:$0xf]
    %v142 = vld [vmem:[#allocation6 + $0x34] sm:$0xf]
    %v143 = vld [vmem:[#allocation6 + $0x38] sm:$0xf]
    %v144 = vld [vmem:[#allocation6 + $0x3c] sm:$0xf]
    %s145 = scalar_lea.vmem [#allocation7], 1
    %v146 = vld [vmem:[%s145] sm:$0x1]
    %v148 = vlaneseq
    %v149 = vshrl.u32 %v148, 7
    %v150 = vsub.s32 0, %v149
    %v151 = vrot.slane %v146, %v150
    %v169 = vunpack.c.l.b16 %v129
    %v170 = vunpack.c.l.b16 %v130
    %v171 = vunpack.c.l.b16 %v131
    %v172 = vunpack.c.l.b16 %v132
    %v173 = vunpack.c.l.b16 %v133
    %v174 = vunpack.c.l.b16 %v134
    %v175 = vunpack.c.l.b16 %v135
    %v176 = vunpack.c.l.b16 %v136
    %v177 = vunpack.c.l.b16 %v137
    %v178 = vunpack.c.l.b16 %v138
    %v179 = vunpack.c.l.b16 %v139
    %v180 = vunpack.c.l.b16 %v140
    %v181 = vunpack.c.l.b16 %v141
    %v182 = vunpack.c.l.b16 %v142
    %v183 = vunpack.c.l.b16 %v143
    %v184 = vunpack.c.l.b16 %v144
    %v185 = vpack.c.b16 %v170, %v169
    %v186 = vpack.c.b16 %v172, %v171
    %v187 = vpack.c.b16 %v174, %v173
    %v188 = vpack.c.b16 %v176, %v175
    %v189 = vpack.c.b16 %v178, %v177
    %v190 = vpack.c.b16 %v180, %v179
    %v191 = vpack.c.b16 %v182, %v181
    %v192 = vpack.c.b16 %v184, %v183
    %201 = vmatprep.subr.bf16.mxu0 0
    %202 = vmatpush1.bf16.msra.mxu0 %v192
    %203 = vmatprep.subr.bf16.mxu0 0
    %204 = vmatpush1.bf16.msra.mxu0 %v191
    %205 = vmatprep.subr.bf16.mxu0 0
    %206 = vmatpush1.bf16.msra.mxu0 %v190
    %207 = vmatprep.subr.bf16.mxu0 0
    %208 = vmatpush1.bf16.msra.mxu0 %v189
    %209 = vmatprep.subr.bf16.mxu0 0
    %210 = vmatpush1.bf16.msra.mxu0 %v188
    %211 = vmatprep.subr.bf16.mxu0 0
    %212 = vmatpush1.bf16.msra.mxu0 %v187
    %213 = vmatprep.subr.bf16.mxu0 0
    %214 = vmatpush1.bf16.msra.mxu0 %v186
    %215 = vmatprep.subr.bf16.mxu0 0
    %216 = vmatpush1.bf16.msra.mxu0 %v185
    %217 = vmatprep.subr.bf16.mxu0 0
    %218 = vmatpush2.bf16.msra.mxu0 0
    %219 = vmatprep.subr.bf16.mxu0 0
    %220 = vmatpush2.bf16.msra.mxu0 0
    %221 = vmatprep.subr.bf16.mxu0 0
    %222 = vmatpush2.bf16.msra.mxu0 0
    %223 = vmatprep.subr.bf16.mxu0 0
    %224 = vmatpush2.bf16.msra.mxu0 0
    %225 = vmatprep.subr.bf16.mxu0 0
    %226 = vmatpush2.bf16.msra.mxu0 0
    %227 = vmatprep.subr.bf16.mxu0 0
    %228 = vmatpush2.bf16.msra.mxu0 0
    %229 = vmatprep.subr.bf16.mxu0 0
    %230 = vmatpush2.bf16.msra.mxu0 0
    %231 = vmatprep.subr.bf16.mxu0 0
    %232 = vmatpush2.bf16.msra.mxu0 0
    %233 = vmatprep.mubr.bf16.mxu0 0
    %234 = vmatmul.mubr.bf16.gmra.mxu0 %v128
    %v235 = vpop.f32.mrf.mxu0
    %v236 = vadd.f32 %v151, %v235
    %v237 = vpop.f32.mrf.mxu0
    %v238 = vpop.f32.mrf.mxu0
    %v239 = vpop.f32.mrf.mxu0
    %240 = vdwg.mxu0
    %v241 = vmax.f32 %v236, 0.0
    %v242 = vpack.c.bf16 %v241, %v241
    %s243 = scalar_lea.vmem [#allocation6], 64
    %v244 = vld [vmem:[%s243] sm:$0xf]
    %v245 = vld [vmem:[%s243 + $0x4] sm:$0xf]
    %v246 = vld [vmem:[%s243 + $0x8] sm:$0xf]
    %v247 = vld [vmem:[%s243 + $0xc] sm:$0xf]
    %v248 = vld [vmem:[%s243 + $0x10] sm:$0xf]
    %v249 = vld [vmem:[%s243 + $0x14] sm:$0xf]
    %v250 = vld [vmem:[%s243 + $0x18] sm:$0xf]
    %v251 = vld [vmem:[%s243 + $0x1c] sm:$0xf]
    %v252 = vld [vmem:[%s243 + $0x20] sm:$0xf]
    %v253 = vld [vmem:[%s243 + $0x24] sm:$0xf]
    %v254 = vld [vmem:[%s243 + $0x28] sm:$0xf]
    %v255 = vld [vmem:[%s243 + $0x2c] sm:$0xf]
    %v256 = vld [vmem:[%s243 + $0x30] sm:$0xf]
    %v257 = vld [vmem:[%s243 + $0x34] sm:$0xf]
    %v258 = vld [vmem:[%s243 + $0x38] sm:$0xf]
    %v259 = vld [vmem:[%s243 + $0x3c] sm:$0xf]
    %s260 = scalar_lea.vmem [#allocation7], 2
    %v261 = vld [vmem:[%s260] sm:$0x1]
    %v263 = vlaneseq
    %v264 = vshrl.u32 %v263, 7
    %v265 = vsub.s32 0, %v264
    %v266 = vrot.slane %v261, %v265
    %v284 = vunpack.c.l.b16 %v244
    %v285 = vunpack.c.l.b16 %v245
    %v286 = vunpack.c.l.b16 %v246
    %v287 = vunpack.c.l.b16 %v247
    %v288 = vunpack.c.l.b16 %v248
    %v289 = vunpack.c.l.b16 %v249
    %v290 = vunpack.c.l.b16 %v250
    %v291 = vunpack.c.l.b16 %v251
    %v292 = vunpack.c.l.b16 %v252
    %v293 = vunpack.c.l.b16 %v253
    %v294 = vunpack.c.l.b16 %v254
    %v295 = vunpack.c.l.b16 %v255
    %v296 = vunpack.c.l.b16 %v256
    %v297 = vunpack.c.l.b16 %v257
    %v298 = vunpack.c.l.b16 %v258
    %v299 = vunpack.c.l.b16 %v259
    %v300 = vpack.c.b16 %v285, %v284
    %v301 = vpack.c.b16 %v287, %v286
    %v302 = vpack.c.b16 %v289, %v288
    %v303 = vpack.c.b16 %v291, %v290
    %v304 = vpack.c.b16 %v293, %v292
    %v305 = vpack.c.b16 %v295, %v294
    %v306 = vpack.c.b16 %v297, %v296
    %v307 = vpack.c.b16 %v299, %v298
    %316 = vmatprep.subr.bf16.mxu0 0
    %317 = vmatpush1.bf16.msra.mxu0 %v307
    %318 = vmatprep.subr.bf16.mxu0 0
    %319 = vmatpush1.bf16.msra.mxu0 %v306
    %320 = vmatprep.subr.bf16.mxu0 0
    %321 = vmatpush1.bf16.msra.mxu0 %v305
    %322 = vmatprep.subr.bf16.mxu0 0
    %323 = vmatpush1.bf16.msra.mxu0 %v304
    %324 = vmatprep.subr.bf16.mxu0 0
    %325 = vmatpush1.bf16.msra.mxu0 %v303
    %326 = vmatprep.subr.bf16.mxu0 0
    %327 = vmatpush1.bf16.msra.mxu0 %v302
    %328 = vmatprep.subr.bf16.mxu0 0
    %329 = vmatpush1.bf16.msra.mxu0 %v301
    %330 = vmatprep.subr.bf16.mxu0 0
    %331 = vmatpush1.bf16.msra.mxu0 %v300
    %332 = vmatprep.subr.bf16.mxu0 0
    %333 = vmatpush2.bf16.msra.mxu0 0
    %334 = vmatprep.subr.bf16.mxu0 0
    %335 = vmatpush2.bf16.msra.mxu0 0
    %336 = vmatprep.subr.bf16.mxu0 0
    %337 = vmatpush2.bf16.msra.mxu0 0
    %338 = vmatprep.subr.bf16.mxu0 0
    %339 = vmatpush2.bf16.msra.mxu0 0
    %340 = vmatprep.subr.bf16.mxu0 0
    %341 = vmatpush2.bf16.msra.mxu0 0
    %342 = vmatprep.subr.bf16.mxu0 0
    %343 = vmatpush2.bf16.msra.mxu0 0
    %344 = vmatprep.subr.bf16.mxu0 0
    %345 = vmatpush2.bf16.msra.mxu0 0
    %346 = vmatprep.subr.bf16.mxu0 0
    %347 = vmatpush2.bf16.msra.mxu0 0
    %348 = vmatprep.mubr.bf16.mxu0 0
    %349 = vmatmul.mubr.bf16.gmra.mxu0 %v242
    %v350 = vpop.f32.mrf.mxu0
    %v351 = vadd.f32 %v266, %v350
    %v352 = vpop.f32.mrf.mxu0
    %v353 = vpop.f32.mrf.mxu0
    %v354 = vpop.f32.mrf.mxu0
    %355 = vdwg.mxu0
    %v356 = vmax.f32 %v351, 0.0
    %v357 = vpack.c.bf16 %v356, %v356
    %s358 = scalar_lea.vmem [#allocation6], 128
    %v359 = vld [vmem:[%s358] sm:$0xf]
    %v360 = vld [vmem:[%s358 + $0x4] sm:$0xf]
    %v361 = vld [vmem:[%s358 + $0x8] sm:$0xf]
    %v362 = vld [vmem:[%s358 + $0xc] sm:$0xf]
    %v363 = vld [vmem:[%s358 + $0x10] sm:$0xf]
    %v364 = vld [vmem:[%s358 + $0x14] sm:$0xf]
    %v365 = vld [vmem:[%s358 + $0x18] sm:$0xf]
    %v366 = vld [vmem:[%s358 + $0x1c] sm:$0xf]
    %v367 = vld [vmem:[%s358 + $0x20] sm:$0xf]
    %v368 = vld [vmem:[%s358 + $0x24] sm:$0xf]
    %v369 = vld [vmem:[%s358 + $0x28] sm:$0xf]
    %v370 = vld [vmem:[%s358 + $0x2c] sm:$0xf]
    %v371 = vld [vmem:[%s358 + $0x30] sm:$0xf]
    %v372 = vld [vmem:[%s358 + $0x34] sm:$0xf]
    %v373 = vld [vmem:[%s358 + $0x38] sm:$0xf]
    %v374 = vld [vmem:[%s358 + $0x3c] sm:$0xf]
    %s375 = scalar_lea.vmem [#allocation7], 3
    %v376 = vld [vmem:[%s375] sm:$0x1]
    %v378 = vlaneseq
    %v379 = vshrl.u32 %v378, 7
    %v380 = vsub.s32 0, %v379
    %v381 = vrot.slane %v376, %v380
    %v399 = vunpack.c.l.b16 %v359
    %v400 = vunpack.c.l.b16 %v360
    %v401 = vunpack.c.l.b16 %v361
    %v402 = vunpack.c.l.b16 %v362
    %v403 = vunpack.c.l.b16 %v363
    %v404 = vunpack.c.l.b16 %v364
    %v405 = vunpack.c.l.b16 %v365
    %v406 = vunpack.c.l.b16 %v366
    %v407 = vunpack.c.l.b16 %v367
    %v408 = vunpack.c.l.b16 %v368
    %v409 = vunpack.c.l.b16 %v369
    %v410 = vunpack.c.l.b16 %v370
    %v411 = vunpack.c.l.b16 %v371
    %v412 = vunpack.c.l.b16 %v372
    %v413 = vunpack.c.l.b16 %v373
    %v414 = vunpack.c.l.b16 %v374
    %v415 = vpack.c.b16 %v400, %v399
    %v416 = vpack.c.b16 %v402, %v401
    %v417 = vpack.c.b16 %v404, %v403
    %v418 = vpack.c.b16 %v406, %v405
    %v419 = vpack.c.b16 %v408, %v407
    %v420 = vpack.c.b16 %v410, %v409
    %v421 = vpack.c.b16 %v412, %v411
    %v422 = vpack.c.b16 %v414, %v413
    %431 = vmatprep.subr.bf16.mxu0 0
    %432 = vmatpush1.bf16.msra.mxu0 %v422
    %433 = vmatprep.subr.bf16.mxu0 0
    %434 = vmatpush1.bf16.msra.mxu0 %v421
    %435 = vmatprep.subr.bf16.mxu0 0
    %436 = vmatpush1.bf16.msra.mxu0 %v420
    %437 = vmatprep.subr.bf16.mxu0 0
    %438 = vmatpush1.bf16.msra.mxu0 %v419
    %439 = vmatprep.subr.bf16.mxu0 0
    %440 = vmatpush1.bf16.msra.mxu0 %v418
    %441 = vmatprep.subr.bf16.mxu0 0
    %442 = vmatpush1.bf16.msra.mxu0 %v417
    %443 = vmatprep.subr.bf16.mxu0 0
    %444 = vmatpush1.bf16.msra.mxu0 %v416
    %445 = vmatprep.subr.bf16.mxu0 0
    %446 = vmatpush1.bf16.msra.mxu0 %v415
    %447 = vmatprep.subr.bf16.mxu0 0
    %448 = vmatpush2.bf16.msra.mxu0 0
    %449 = vmatprep.subr.bf16.mxu0 0
    %450 = vmatpush2.bf16.msra.mxu0 0
    %451 = vmatprep.subr.bf16.mxu0 0
    %452 = vmatpush2.bf16.msra.mxu0 0
    %453 = vmatprep.subr.bf16.mxu0 0
    %454 = vmatpush2.bf16.msra.mxu0 0
    %455 = vmatprep.subr.bf16.mxu0 0
    %456 = vmatpush2.bf16.msra.mxu0 0
    %457 = vmatprep.subr.bf16.mxu0 0
    %458 = vmatpush2.bf16.msra.mxu0 0
    %459 = vmatprep.subr.bf16.mxu0 0
    %460 = vmatpush2.bf16.msra.mxu0 0
    %461 = vmatprep.subr.bf16.mxu0 0
    %462 = vmatpush2.bf16.msra.mxu0 0
    %463 = vmatprep.mubr.bf16.mxu0 0
    %464 = vmatmul.mubr.bf16.gmra.mxu0 %v357
    %v465 = vpop.f32.mrf.mxu0
    %v466 = vadd.f32 %v381, %v465
    %v467 = vpop.f32.mrf.mxu0
    %v468 = vpop.f32.mrf.mxu0
    %v469 = vpop.f32.mrf.mxu0
    %470 = vdwg.mxu0
    %471 = vst [vmem:[%s4] sm:$0xff] %v466
    // Predicated region
    $region34: #{qnetwork_forward.1} parent=1 // pred_check
      _
    $region35: #{qnetwork_forward.1} parent=1 // pred_check_branch
      %473 = sbr.rel (0) target = $region37
    $region36: #{qnetwork_forward.1} parent=1 // pred_region
      _
    $region37: #{qnetwork_forward.1} parent=1 // pred_fallthru
      _
    // Predicated region
    $region38: #{qnetwork_forward.1} parent=1 // pred_check
      _
    $region39: #{qnetwork_forward.1} parent=1 // pred_check_branch
      %475 = sbr.rel (0) target = $region41
    $region40: #{qnetwork_forward.1} parent=1 // pred_region
      _
    $region41: #{qnetwork_forward.1} parent=1 // pred_fallthru
      _
    %476 = vsyncpa [#allocation3], 1
    %477 = vsyncpa [#allocation5], 1
    %478 = vsyncpa [#allocation8], 1

</llo_original>
